<compile_context>
chip_gen: v6e
topology: v6e:2x2x1
jax: 0.10.0
libtpu: 0.0.40
codegen_flags: <defaults>
</compile_context>

<pallas_src>
import math
import numpy as np
import jax
import jax.numpy as jnp
from jax.experimental import pallas as pl
from jax.experimental.pallas import tpu as pltpu


# ----------------------------------------------------------------------------
# Host-side neighbor selection (faithful numpy port of the torch list code)
# ----------------------------------------------------------------------------
def choose_step_neighs_np(center_scores, center_labels, neigh_scores, neighs_list,
                          minor_scores, minor_list, sample_list, sample_rate):
    samp_neighs, samp_score_diff = [], []
    for idx in range(len(center_scores)):
        center_score = center_scores[idx][0]
        neigh_score = neigh_scores[idx][:, 0]
        neighs_indices = neighs_list[idx]
        num_sample = sample_list[idx]
        score_diff_neigh = np.abs(center_score - neigh_score)
        sorted_order = np.argsort(score_diff_neigh, kind="stable")
        if len(neigh_scores[idx]) > num_sample + 1:
            selected_neighs = [neighs_indices[n] for n in sorted_order[:num_sample]]
            selected_score_diff = list(score_diff_neigh[sorted_order][:num_sample])
        else:
            selected_neighs = list(neighs_indices)
            selected_score_diff = list(np.atleast_1d(score_diff_neigh))
        if center_labels[idx] == 1:
            num_oversample = int(num_sample * sample_rate)
            score_diff_minor = np.abs(center_score - minor_scores[:, 0])
            sorted_minor = np.argsort(score_diff_minor, kind="stable")
            selected_neighs.extend(
                [minor_list[n] for n in sorted_minor[:num_oversample]])
            selected_score_diff.extend(
                list(score_diff_minor[sorted_minor][:num_oversample]))
        samp_neighs.append(set(selected_neighs))
        samp_score_diff.append(selected_score_diff)
    return samp_neighs, samp_score_diff


def choose_step_test_np(center_scores, neigh_scores, neighs_list, sample_list):
    samp_neighs, samp_scores = [], []
    for idx in range(len(center_scores)):
        center_score = center_scores[idx][0]
        neigh_score = neigh_scores[idx][:, 0]
        neighs_indices = neighs_list[idx]
        num_sample = sample_list[idx]
        score_diff = np.abs(center_score - neigh_score)
        sorted_order = np.argsort(score_diff, kind="stable")
        if len(neigh_scores[idx]) > num_sample + 1:
            selected_neighs = [neighs_indices[n] for n in sorted_order[:num_sample]]
            selected_scores = list(score_diff[sorted_order][:num_sample])
        else:
            selected_neighs = list(neighs_indices)
            selected_scores = list(np.atleast_1d(score_diff))
        samp_neighs.append(set(selected_neighs))
        samp_scores.append(selected_scores)
    return samp_neighs, samp_scores


# ----------------------------------------------------------------------------
# Pallas kernel: tiled mean-aggregate + fused two-dot projection + ReLU
# ----------------------------------------------------------------------------
def intra_agg_kernel(mask_ref, self_ref, embed_ref, inv_ref, wself_ref, wagg_ref,
                     out_ref, acc_ref):
    k = pl.program_id(1)

    @pl.when(k == 0)
    def _init():
        acc_ref[...] = jnp.zeros_like(acc_ref)

    # Native bf16 x bf16 MXU matmul, f32 accumulation (mask 0/1 is exact in bf16).
    acc_ref[...] += jnp.dot(mask_ref[...], embed_ref[...],
                            preferred_element_type=jnp.float32)   # (tB, Dp)

    @pl.when(k == pl.num_programs(1) - 1)
    def _finalize():
        # relu(cat([self, mean_agg], 1) @ W) == relu(self@W_self + mean_agg@W_agg)
        agg = acc_ref[...] * inv_ref[...]                          # (tB,Dp)*(tB,1)
        pre = jnp.dot(self_ref[...], wself_ref[...],
                      preferred_element_type=jnp.float32)          # (tB, Ep)
        pre = pre + jnp.dot(agg, wagg_ref[...],
                            preferred_element_type=jnp.float32)
        out_ref[...] = jnp.maximum(pre, 0.0)


def _round_up(x, m):
    return ((x + m - 1) // m) * m


def _choose_tile(total, align, max_tile, prefer_multi=False):
    """Pick a tile size (multiple of `align`, <= max_tile) that minimizes padding,
    then (optionally) prefers >=2 tiles (megacore), then prefers larger tiles."""
    upper = min(max_tile, _round_up(total, align))
    best, best_key = None, None
    for t in range(align, upper + 1, align):
        padded = _round_up(total, t)
        pad = padded - total
        ntiles = padded // t
        multi_penalty = 0 if (not prefer_multi or ntiles >= 2) else 1
        key = (pad, multi_penalty, -t)
        if best_key is None or key < best_key:
            best_key, best = key, t
    return best


def intra_agg_pallas(mask_np, self_np, embed_np, inv_np, weight):
    """mask: (B,U) 0/1, self: (B,D), embed: (U,D), inv: (B,) = 1/num_neigh (0 if no
    neighbors), weight: (2D,E). Returns relu(cat([self,(mask@embed)*inv],1)@weight)."""
    B, U = mask_np.shape
    D = self_np.shape[1]
    w_np = np.asarray(weight, np.float32)
    E = w_np.shape[1]

    Dp = _round_up(D, 128)
    Ep = _round_up(E, 128)

    # Batch tile: multiple of 16 (bf16 sublane packing), minimal padding, prefer
    # >=2 tiles so v7x megacore can split the "parallel" axis.
    tB = _choose_tile(B, 16, 512, prefer_multi=True)
    Bp = _round_up(B, tB)

    # U tile: keep the whole (padded) embed resident when it is small (constant
    # block index -> single DMA for the entire kernel); otherwise minimize padding.
    U_full = _round_up(max(U, 1), 128)
    if U_full * Dp * 2 <= 4 * 1024 * 1024 and U_full <= 4096:
        tU = U_full
    else:
        tU = _choose_tile(U, 128, 2048)
    Up = _round_up(U, tU)

    # Host-side padding (padded rows/cols are zero => neutral in every matmul).
    mask_p = np.zeros((Bp, Up), np.float32); mask_p[:B, :U] = mask_np
    self_p = np.zeros((Bp, Dp), np.float32); self_p[:B, :D] = self_np
    embed_p = np.zeros((Up, Dp), np.float32); embed_p[:U, :D] = embed_np
    inv_p = np.zeros((Bp, 1), np.float32); inv_p[:B, 0] = inv_np
    wself_p = np.zeros((Dp, Ep), np.float32); wself_p[:D, :E] = w_np[:D]
    wagg_p = np.zeros((Dp, Ep), np.float32); wagg_p[:D, :E] = w_np[D:2 * D]

    grid = (Bp // tB, Up // tU)

    out = pl.pallas_call(
        intra_agg_kernel,
        out_shape=jax.ShapeDtypeStruct((Bp, Ep), jnp.float32),
        grid_spec=pltpu.PrefetchScalarGridSpec(
            num_scalar_prefetch=0,
            grid=grid,
            in_specs=[
                pl.BlockSpec((tB, tU), lambda i, k: (i, k)),    # mask (bf16)
                pl.BlockSpec((tB, Dp), lambda i, k: (i, 0)),    # self feats (f32)
                pl.BlockSpec((tU, Dp), lambda i, k: (k, 0)),    # embed rows (bf16)
                pl.BlockSpec((tB, 1), lambda i, k: (i, 0)),     # 1/num_neigh
                pl.BlockSpec((Dp, Ep), lambda i, k: (0, 0)),    # W_self
                pl.BlockSpec((Dp, Ep), lambda i, k: (0, 0)),    # W_agg
            ],
            out_specs=pl.BlockSpec((tB, Ep), lambda i, k: (i, 0)),
            scratch_shapes=[
                pltpu.VMEM((tB, Dp), jnp.float32),              # f32 aggregate acc
            ],
        ),
        compiler_params=pltpu.CompilerParams(
            dimension_semantics=("parallel", "arbitrary"),
            vmem_limit_bytes=48 * 1024 * 1024,
        ),
    )(
        jnp.asarray(mask_p, dtype=jnp.bfloat16),
        jnp.asarray(self_p),
        jnp.asarray(embed_p, dtype=jnp.bfloat16),
        jnp.asarray(inv_p),
        jnp.asarray(wself_p),
        jnp.asarray(wagg_p),
    )
    return out[:B, :E]


# ----------------------------------------------------------------------------
# Full IntraAgg.forward (sampling glue + Pallas hot path)
# ----------------------------------------------------------------------------
def intra_agg_forward(features, weight, nodes, batch_labels, to_neighs_list,
                      batch_scores, neigh_scores, pos_scores, train_pos,
                      sample_list, rho, train_flag):
    if train_flag:
        samp_neighs, samp_scores = choose_step_neighs_np(
            batch_scores, batch_labels, neigh_scores, to_neighs_list,
            pos_scores, train_pos, sample_list, rho)
    else:
        samp_neighs, samp_scores = choose_step_test_np(
            batch_scores, neigh_scores, to_neighs_list, sample_list)

    unique_nodes_list = list(set.union(*samp_neighs))
    unique_nodes = {n: i for i, n in enumerate(unique_nodes_list)}

    B, U = len(samp_neighs), len(unique_nodes_list)
    mask = np.zeros((B, U), dtype=np.float32)
    col = [unique_nodes[n] for sn in samp_neighs for n in sn]
    row = [i for i in range(B) for _ in range(len(samp_neighs[i]))]
    mask[row, col] = 1.0

    # 1/num_neigh on host, guarded against zero-neighbor rows (no inf/NaN).
    num_neigh = mask.sum(axis=1)
    inv = np.where(num_neigh > 0.0,
                   1.0 / np.maximum(num_neigh, 1.0), 0.0).astype(np.float32)

    self_feats = features[np.asarray(nodes)]                  # (B, D)
    embed_matrix = features[np.asarray(unique_nodes_list)]    # (U, D)

    to_feats = intra_agg_pallas(mask, self_feats, embed_matrix, inv, weight)
    return to_feats, samp_scores, mask, self_feats, embed_matrix


# ----------------------------------------------------------------------------
if __name__ == "__main__":
    # Small synthetic problem sizes
    N_NODES, FEAT_DIM, EMBED_DIM, B = 64, 32, 32, 8
    RHO = 0.5

    key = jax.random.PRNGKey(0)
    k_feat, k_w, k_sc = jax.random.split(key, 3)

    # Node features table (plays the role of self.features lookup)
    features = np.asarray(jax.random.normal(k_feat, (N_NODES, FEAT_DIM)),
                          dtype=np.float32)

    # xavier_uniform_ init of weight (2*feat_dim, embed_dim)
    bound = math.sqrt(6.0 / (2 * FEAT_DIM + EMBED_DIM))
    weight = jax.random.uniform(k_w, (2 * FEAT_DIM, EMBED_DIM),
                                minval=-bound, maxval=bound, dtype=jnp.float32)

    rng = np.random.default_rng(0)
    nodes = rng.choice(N_NODES, size=B, replace=False).tolist()
    batch_labels = rng.integers(0, 2, size=B).tolist()
    to_neighs_list = [rng.choice(N_NODES, size=int(rng.integers(4, 10)),
                                 replace=False).tolist() for _ in range(B)]
    batch_scores = np.asarray(jax.random.normal(k_sc, (B, 2)), dtype=np.float32)
    neigh_scores = [np.asarray(rng.standard_normal((len(nl), 2)), dtype=np.float32)
                    for nl in to_neighs_list]
    train_pos = rng.choice(N_NODES, size=6, replace=False).tolist()
    pos_scores = np.asarray(rng.standard_normal((len(train_pos), 2)), dtype=np.float32)
    sample_list = [3] * B
    train_flag = True

    to_feats, samp_scores, mask, self_feats, embed_matrix = intra_agg_forward(
        features, weight, nodes, batch_labels, to_neighs_list, batch_scores,
        neigh_scores, pos_scores, train_pos, sample_list, RHO, train_flag)
    to_feats = jax.block_until_ready(to_feats)

    # Reference check (plain numpy f32, matches the PyTorch forward math).
    # Kernel streams mask/embed in bf16 for the native MXU path -> ~1e-2 tolerance.
    mask_n = mask / mask.sum(axis=1, keepdims=True)
    agg = mask_n @ embed_matrix
    cat = np.concatenate([self_feats, agg], axis=1)
    ref = np.maximum(cat @ np.asarray(weight), 0.0)
    np.testing.assert_allclose(np.asarray(to_feats), ref, rtol=1e-2, atol=1e-2)

    assert to_feats.shape == (B, EMBED_DIM)
    print("KERNEL_OK")
</pallas_src>

<mosaic_0001>
module attributes {stable_mosaic.version = 11 : i64} {
  func.func @intra_agg_kernel(%arg0: i32, %arg1: i32, %arg2: memref<16x128xbf16, #tpu.memory_space<vmem>>, %arg3: memref<16x128xf32, #tpu.memory_space<vmem>>, %arg4: memref<128x128xbf16, #tpu.memory_space<vmem>>, %arg5: memref<16x1xf32, #tpu.memory_space<vmem>>, %arg6: memref<128x128xf32, #tpu.memory_space<vmem>>, %arg7: memref<128x128xf32, #tpu.memory_space<vmem>>, %arg8: memref<16x128xf32, #tpu.memory_space<vmem>>, %arg9: memref<16x128xf32, #tpu.memory_space<vmem>>) attributes {dimension_semantics = [#tpu.dimension_semantics<parallel>, #tpu.dimension_semantics<arbitrary>], iteration_bounds = array<i64: 1, 1>, scalar_prefetch = 0 : i64, scratch_operands = 1 : i64, tpu.core_type = #tpu.core_type<tc>, window_params = [{transform_indices = @transform_0, window_bounds = array<i64: 16, 128>}, {transform_indices = @transform_1, window_bounds = array<i64: 16, 128>}, {transform_indices = @transform_2, window_bounds = array<i64: 128, 128>}, {transform_indices = @transform_3, window_bounds = array<i64: 16, 1>}, {pipeline_mode = #tpu.pipeline_mode<synchronous>, transform_indices = @transform_4, window_bounds = array<i64: 128, 128>}, {pipeline_mode = #tpu.pipeline_mode<synchronous>, transform_indices = @transform_5, window_bounds = array<i64: 128, 128>}, {transform_indices = @transform_6, window_bounds = array<i64: 16, 128>}]} {
    %c0_i32 = arith.constant 0 : i32
    %0 = arith.cmpi eq, %arg1, %c0_i32 : i32
    %1 = arith.extui %0 : i1 to i32
    %c0_i32_0 = arith.constant 0 : i32
    %2 = arith.cmpi ne, %1, %c0_i32_0 : i32
    scf.if %2 {
      %cst_10 = arith.constant 0.000000e+00 : f32
      %12 = vector.broadcast %cst_10 : f32 to vector<16x128xf32>
      %c0_11 = arith.constant 0 : index
      %c0_12 = arith.constant 0 : index
      %13 = vector.load %arg9[%c0_11, %c0_12] : memref<16x128xf32, #tpu.memory_space<vmem>>, vector<16x128xf32>
      tpu.vector_store %arg9[%c0_11, %c0_12], %12 {strides = array<i32>} : memref<16x128xf32, #tpu.memory_space<vmem>>, vector<16x128xf32>,
    } else {
    }
    %c0 = arith.constant 0 : index
    %c0_1 = arith.constant 0 : index
    %3 = vector.load %arg9[%c0, %c0_1] : memref<16x128xf32, #tpu.memory_space<vmem>>, vector<16x128xf32>
    %c0_2 = arith.constant 0 : index
    %c0_3 = arith.constant 0 : index
    %4 = vector.load %arg2[%c0_2, %c0_3] : memref<16x128xbf16, #tpu.memory_space<vmem>>, vector<16x128xbf16>
    %c0_4 = arith.constant 0 : index
    %c0_5 = arith.constant 0 : index
    %5 = vector.load %arg4[%c0_4, %c0_5] : memref<128x128xbf16, #tpu.memory_space<vmem>>, vector<128x128xbf16>
    %cst = arith.constant dense<0.000000e+00> : vector<16x128xf32>
    %6 = tpu.matmul %4, %5, %cst {dimension_numbers = #tpu.dot_dimension_numbers<[1], [0], [0], [1], [0, 0, 1, 1], [], []>} : vector<16x128xbf16>, vector<128x128xbf16>, vector<16x128xf32> -> vector<16x128xf32>
    %7 = arith.addf %3, %6 : vector<16x128xf32>
    %c0_6 = arith.constant 0 : index
    %c0_7 = arith.constant 0 : index
    %8 = vector.load %arg9[%c0_6, %c0_7] : memref<16x128xf32, #tpu.memory_space<vmem>>, vector<16x128xf32>
    tpu.vector_store %arg9[%c0_6, %c0_7], %7 {strides = array<i32>} : memref<16x128xf32, #tpu.memory_space<vmem>>, vector<16x128xf32>,
    %c0_i32_8 = arith.constant 0 : i32
    %9 = arith.cmpi eq, %arg1, %c0_i32_8 : i32
    %10 = arith.extui %9 : i1 to i32
    %c0_i32_9 = arith.constant 0 : i32
    %11 = arith.cmpi ne, %10, %c0_i32_9 : i32
    scf.if %11 {
      %c0_10 = arith.constant 0 : index
      %c0_11 = arith.constant 0 : index
      %12 = vector.load %arg9[%c0_10, %c0_11] : memref<16x128xf32, #tpu.memory_space<vmem>>, vector<16x128xf32>
      %c0_12 = arith.constant 0 : index
      %c0_13 = arith.constant 0 : index
      %13 = vector.load %arg5[%c0_12, %c0_13] : memref<16x1xf32, #tpu.memory_space<vmem>>, vector<16x1xf32>
      %14 = vector.broadcast %13 : vector<16x1xf32> to vector<16x128xf32>
      %15 = arith.mulf %12, %14 : vector<16x128xf32>
      %c0_14 = arith.constant 0 : index
      %c0_15 = arith.constant 0 : index
      %16 = vector.load %arg3[%c0_14, %c0_15] : memref<16x128xf32, #tpu.memory_space<vmem>>, vector<16x128xf32>
      %c0_16 = arith.constant 0 : index
      %c0_17 = arith.constant 0 : index
      %17 = vector.load %arg6[%c0_16, %c0_17] : memref<128x128xf32, #tpu.memory_space<vmem>>, vector<128x128xf32>
      %cst_18 = arith.constant dense<0.000000e+00> : vector<16x128xf32>
      %18 = tpu.matmul %16, %17, %cst_18 {dimension_numbers = #tpu.dot_dimension_numbers<[1], [0], [0], [1], [0, 0, 1, 1], [], []>} : vector<16x128xf32>, vector<128x128xf32>, vector<16x128xf32> -> vector<16x128xf32>
      %c0_19 = arith.constant 0 : index
      %c0_20 = arith.constant 0 : index
      %19 = vector.load %arg7[%c0_19, %c0_20] : memref<128x128xf32, #tpu.memory_space<vmem>>, vector<128x128xf32>
      %cst_21 = arith.constant dense<0.000000e+00> : vector<16x128xf32>
      %20 = tpu.matmul %15, %19, %cst_21 {dimension_numbers = #tpu.dot_dimension_numbers<[1], [0], [0], [1], [0, 0, 1, 1], [], []>} : vector<16x128xf32>, vector<128x128xf32>, vector<16x128xf32> -> vector<16x128xf32>
      %21 = arith.addf %18, %20 : vector<16x128xf32>
      %cst_22 = arith.constant 0.000000e+00 : f32
      %22 = vector.broadcast %cst_22 : f32 to vector<16x128xf32>
      %23 = arith.maximumf %21, %22 : vector<16x128xf32>
      %c0_23 = arith.constant 0 : index
      %c0_24 = arith.constant 0 : index
      %24 = vector.load %arg8[%c0_23, %c0_24] : memref<16x128xf32, #tpu.memory_space<vmem>>, vector<16x128xf32>
      tpu.vector_store %arg8[%c0_23, %c0_24], %23 {strides = array<i32>} : memref<16x128xf32, #tpu.memory_space<vmem>>, vector<16x128xf32>,
    } else {
    }
    return
  }
  func.func @transform_0(%arg0: i32, %arg1: i32) -> (i32, i32) {
    %c0_i32 = arith.constant 0 : i32
    return %arg0, %arg1 : i32, i32
  }
  func.func @transform_1(%arg0: i32, %arg1: i32) -> (i32, i32) {
    %c0_i32 = arith.constant 0 : i32
    %c0_i32_0 = arith.constant 0 : i32
    return %arg0, %c0_i32 : i32, i32
  }
  func.func @transform_2(%arg0: i32, %arg1: i32) -> (i32, i32) {
    %c0_i32 = arith.constant 0 : i32
    %c0_i32_0 = arith.constant 0 : i32
    return %arg1, %c0_i32 : i32, i32
  }
  func.func @transform_3(%arg0: i32, %arg1: i32) -> (i32, i32) {
    %c0_i32 = arith.constant 0 : i32
    %c0_i32_0 = arith.constant 0 : i32
    return %arg0, %c0_i32 : i32, i32
  }
  func.func @transform_4(%arg0: i32, %arg1: i32) -> (i32, i32) {
    %c0_i32 = arith.constant 0 : i32
    %c0_i32_0 = arith.constant 0 : i32
    %c0_i32_1 = arith.constant 0 : i32
    return %c0_i32, %c0_i32_0 : i32, i32
  }
  func.func @transform_5(%arg0: i32, %arg1: i32) -> (i32, i32) {
    %c0_i32 = arith.constant 0 : i32
    %c0_i32_0 = arith.constant 0 : i32
    %c0_i32_1 = arith.constant 0 : i32
    return %c0_i32, %c0_i32_0 : i32, i32
  }
  func.func @transform_6(%arg0: i32, %arg1: i32) -> (i32, i32) {
    %c0_i32 = arith.constant 0 : i32
    %c0_i32_0 = arith.constant 0 : i32
    return %arg0, %c0_i32 : i32, i32
  }
}

</mosaic_0001>

<llo_original>
// kernel: tpu_custom_call.1
$region0: #{tpu_custom_call.1}
  #allocation0 [shape = 'u32[]', space=smem, size = 0x4, offset = 0x4, fixed_abs, tag = 'smem constant byte address 0x4 - core index']
  #allocation1 [shape = 'u32[144,128]{1,0:T(1,128)}', space=vmem, size = 0x12000, scoped, tag = 'internal scratch']
  #allocation2 [shape = 'f32[16,128]{1,0:T(8,128)}', space=vmem, size = 0x2000, scoped, tag = 'scratch operand']
  %s0 = inlined_call_operand.hbm [shape: bf16[16,128], index: 0, kind: input, shape index: {}]
  %s1 = inlined_call_operand.vmem [shape: f32[16,128], index: 1, kind: input, shape index: {}]
  %s2 = inlined_call_operand.hbm [shape: bf16[128,128], index: 2, kind: input, shape index: {}]
  %s3 = inlined_call_operand.vmem [shape: f32[16,1], index: 3, kind: input, shape index: {}]
  %s4 = inlined_call_operand.hbm [shape: f32[128,128], index: 4, kind: input, shape index: {}]
  %s5 = inlined_call_operand.hbm [shape: f32[128,128], index: 5, kind: input, shape index: {}]
  %s6 = inlined_call_operand.hbm [shape: f32[16,128], index: 6, kind: output, shape index: {}]
  %s7 = sld [smem:[#allocation0]]
  $region58: #{tpu_custom_call.1} parent=0
    _
  %s9 = ssub.s32 1, %s7
  %s10 = scalar_select 0, %s9, %s7
  $region1: #{tpu_custom_call.1} parent=0
    #allocation3 [shape = 'u8[4096]{0}', space=vmem, size = 0x1000, scoped, tag = 'input window, operand 0, single buffered']
    #allocation4 [shape = 's32[1]{0}', space=sflag, size = 0x4, scoped, tag = 'scoped memory for tpu_custom_call.1']
    #allocation5 [shape = 's32[1]{0}', space=sflag, size = 0x4, scoped, tag = 'scoped memory for tpu_custom_call.1']
    #allocation6 [shape = 'u8[32768]{0}', space=vmem, size = 0x8000, scoped, tag = 'input window, operand 2, single buffered']
    #allocation7 [shape = 's32[1]{0}', space=sflag, size = 0x4, scoped, tag = 'scoped memory for tpu_custom_call.1']
    #allocation8 [shape = 'u8[65536]{0}', space=vmem, size = 0x10000, scoped, tag = 'input window, operand 4, single buffered']
    #allocation9 [shape = 'u8[65536]{0}', space=vmem, size = 0x10000, scoped, tag = 'input window, operand 5, single buffered']
    #allocation10 [shape = 's32[1]{0}', space=sflag, size = 0x4, scoped, tag = 'scoped memory for tpu_custom_call.1']
    #allocation11 [shape = 'u8[8192]{0}', space=vmem, size = 0x2000, scoped, tag = 'output window, operand 0, single buffered']
    %11 = vsyncpa [#allocation4], 0
    %12 = vsyncpa [#allocation7], 0
    %13 = vsyncpa [#allocation10], 0
    %14 = vsyncpa [#allocation5], 0
    // Predicated region
    $region2: #{tpu_custom_call.1} parent=1 // pred_check
      _
    $region3: #{tpu_custom_call.1} parent=1 // pred_check_branch
      %16 = sbr.rel (0) target = $region5
    $region4: #{tpu_custom_call.1} parent=1 // pred_region
      %s18 = ssub.s32 128, 128
      %19 = vsyncadd [#allocation4], %s18
      %s20 = sshll.u32 [#allocation3], 4
      %s21 = int_to_ptr.vmem [resolvable:$true] %s20
      %26 = dma.hbm_to_vmem [thread:$0]  %s0, 128, %s21, [#allocation4], 64, 64, 4
    $region5: #{tpu_custom_call.1} parent=1 // pred_fallthru
      _
    // Predicated region
    $region6: #{tpu_custom_call.1} parent=1 // pred_check
      _
    $region7: #{tpu_custom_call.1} parent=1 // pred_check_branch
      %28 = sbr.rel (0) target = $region9
    $region8: #{tpu_custom_call.1} parent=1 // pred_region
      _
    $region9: #{tpu_custom_call.1} parent=1 // pred_fallthru
      _
    // Predicated region
    $region10: #{tpu_custom_call.1} parent=1 // pred_check
      _
    $region11: #{tpu_custom_call.1} parent=1 // pred_check_branch
      %30 = sbr.rel (0) target = $region13
    $region12: #{tpu_custom_call.1} parent=1 // pred_region
      %s32 = ssub.s32 1024, 1024
      %33 = vsyncadd [#allocation7], %s32
      %s34 = sshll.u32 [#allocation6], 4
      %s35 = int_to_ptr.vmem [resolvable:$true] %s34
      %40 = dma.hbm_to_vmem [thread:$0]  %s2, 1024, %s35, [#allocation7], 64, 64, 4
    $region13: #{tpu_custom_call.1} parent=1 // pred_fallthru
      _
    // Predicated region
    $region14: #{tpu_custom_call.1} parent=1 // pred_check
      _
    $region15: #{tpu_custom_call.1} parent=1 // pred_check_branch
      %42 = sbr.rel (0) target = $region17
    $region16: #{tpu_custom_call.1} parent=1 // pred_region
      _
    $region17: #{tpu_custom_call.1} parent=1 // pred_fallthru
      _
    // Predicated region
    $region18: #{tpu_custom_call.1} parent=1 // pred_check
      _
    $region19: #{tpu_custom_call.1} parent=1 // pred_check_branch
      %44 = sbr.rel (0) target = $region21
    $region20: #{tpu_custom_call.1} parent=1 // pred_region
      %s46 = ssub.s32 2048, 2048
      %47 = vsyncadd [#allocation7], %s46
      %s48 = sshll.u32 [#allocation8], 4
      %s49 = int_to_ptr.vmem [resolvable:$true] %s48
      %54 = dma.hbm_to_vmem [thread:$0]  %s4, 2048, %s49, [#allocation7], 128, 128, 8
    $region21: #{tpu_custom_call.1} parent=1 // pred_fallthru
      _
    // Predicated region
    $region22: #{tpu_custom_call.1} parent=1 // pred_check
      _
    $region23: #{tpu_custom_call.1} parent=1 // pred_check_branch
      %56 = sbr.rel (0) target = $region25
    $region24: #{tpu_custom_call.1} parent=1 // pred_region
      %s58 = ssub.s32 2048, 2048
      %59 = vsyncadd [#allocation10], %s58
      %s60 = sshll.u32 [#allocation9], 4
      %s61 = int_to_ptr.vmem [resolvable:$true] %s60
      %66 = dma.hbm_to_vmem [thread:$0]  %s5, 2048, %s61, [#allocation10], 128, 128, 8
    $region25: #{tpu_custom_call.1} parent=1 // pred_fallthru
      _
    // Predicated region
    $region26: #{tpu_custom_call.1} parent=1 // pred_check
      _
    $region27: #{tpu_custom_call.1} parent=1 // pred_check_branch
      %68 = sbr.rel (0) target = $region29
    $region28: #{tpu_custom_call.1} parent=1 // pred_region
      %69 = dma.done [#allocation4], 128
    $region29: #{tpu_custom_call.1} parent=1 // pred_fallthru
      _
    // Predicated region
    $region30: #{tpu_custom_call.1} parent=1 // pred_check
      _
    $region31: #{tpu_custom_call.1} parent=1 // pred_check_branch
      %71 = sbr.rel (0) target = $region33
    $region32: #{tpu_custom_call.1} parent=1 // pred_region
      %72 = dma.done [#allocation7], 1024
    $region33: #{tpu_custom_call.1} parent=1 // pred_fallthru
      _
    // Predicated region
    $region34: #{tpu_custom_call.1} parent=1 // pred_check
      _
    $region35: #{tpu_custom_call.1} parent=1 // pred_check_branch
      %74 = sbr.rel (0) target = $region37
    $region36: #{tpu_custom_call.1} parent=1 // pred_region
      %75 = dma.done [#allocation7], 2048
    $region37: #{tpu_custom_call.1} parent=1 // pred_fallthru
      _
    // Predicated region
    $region38: #{tpu_custom_call.1} parent=1 // pred_check
      _
    $region39: #{tpu_custom_call.1} parent=1 // pred_check_branch
      %77 = sbr.rel (0) target = $region41
    $region40: #{tpu_custom_call.1} parent=1 // pred_region
      %78 = dma.done [#allocation10], 2048
    $region41: #{tpu_custom_call.1} parent=1 // pred_fallthru
      _
    %p80 = scmp.eq.s32.totalorder 0, 0
    // Predicated region
    $region42: #{tpu_custom_call.1} parent=1 // pred_check
      %p81 = pneg %p80
    $region43: #{tpu_custom_call.1} parent=1 // pred_check_branch
      %83 = sbr.rel (%p81) target = $region45
    $region44: #{tpu_custom_call.1} parent=1 // pred_region
      %84 = vst [vmem:[#allocation2] sm:$0xff] 0.0
      %85 = vst [vmem:[#allocation2 + $0x8] sm:$0xff] 0.0
    $region45: #{tpu_custom_call.1} parent=1 // pred_fallthru
      _
    %v86 = vld [vmem:[#allocation2] sm:$0xff]
    %v87 = vld [vmem:[#allocation2 + $0x8] sm:$0xff]
    %v88 = vld [vmem:[#allocation3] sm:$0xf]
    %v89 = vld [vmem:[#allocation3 + $0x4] sm:$0xf]
    %v90 = vld [vmem:[#allocation6] sm:$0xf]
    %v91 = vld [vmem:[#allocation6 + $0x4] sm:$0xf]
    %v92 = vld [vmem:[#allocation6 + $0x8] sm:$0xf]
    %v93 = vld [vmem:[#allocation6 + $0xc] sm:$0xf]
    %v94 = vld [vmem:[#allocation6 + $0x10] sm:$0xf]
    %v95 = vld [vmem:[#allocation6 + $0x14] sm:$0xf]
    %v96 = vld [vmem:[#allocation6 + $0x18] sm:$0xf]
    %v97 = vld [vmem:[#allocation6 + $0x1c] sm:$0xf]
    %v98 = vld [vmem:[#allocation6 + $0x20] sm:$0xf]
    %v99 = vld [vmem:[#allocation6 + $0x24] sm:$0xf]
    %v100 = vld [vmem:[#allocation6 + $0x28] sm:$0xf]
    %v101 = vld [vmem:[#allocation6 + $0x2c] sm:$0xf]
    %v102 = vld [vmem:[#allocation6 + $0x30] sm:$0xf]
    %v103 = vld [vmem:[#allocation6 + $0x34] sm:$0xf]
    %v104 = vld [vmem:[#allocation6 + $0x38] sm:$0xf]
    %v105 = vld [vmem:[#allocation6 + $0x3c] sm:$0xf]
    %v108 = vunpack.c.l.b16 %v88
    %v109 = vunpack.c.l.b16 %v89
    %v110 = vpack.c.b16 %v109, %v108
    %v128 = vunpack.c.l.b16 %v90
    %v129 = vunpack.c.l.b16 %v91
    %v130 = vunpack.c.l.b16 %v92
    %v131 = vunpack.c.l.b16 %v93
    %v132 = vunpack.c.l.b16 %v94
    %v133 = vunpack.c.l.b16 %v95
    %v134 = vunpack.c.l.b16 %v96
    %v135 = vunpack.c.l.b16 %v97
    %v136 = vunpack.c.l.b16 %v98
    %v137 = vunpack.c.l.b16 %v99
    %v138 = vunpack.c.l.b16 %v100
    %v139 = vunpack.c.l.b16 %v101
    %v140 = vunpack.c.l.b16 %v102
    %v141 = vunpack.c.l.b16 %v103
    %v142 = vunpack.c.l.b16 %v104
    %v143 = vunpack.c.l.b16 %v105
    %v144 = vpack.c.b16 %v129, %v128
    %v145 = vpack.c.b16 %v131, %v130
    %v146 = vpack.c.b16 %v133, %v132
    %v147 = vpack.c.b16 %v135, %v134
    %v148 = vpack.c.b16 %v137, %v136
    %v149 = vpack.c.b16 %v139, %v138
    %v150 = vpack.c.b16 %v141, %v140
    %v151 = vpack.c.b16 %v143, %v142
    %160 = vmatprep.subr.bf16.mxu0 0
    %161 = vmatpush1.bf16.msra.mxu0 %v151
    %162 = vmatprep.subr.bf16.mxu0 0
    %163 = vmatpush1.bf16.msra.mxu0 %v150
    %164 = vmatprep.subr.bf16.mxu0 0
    %165 = vmatpush1.bf16.msra.mxu0 %v149
    %166 = vmatprep.subr.bf16.mxu0 0
    %167 = vmatpush1.bf16.msra.mxu0 %v148
    %168 = vmatprep.subr.bf16.mxu0 0
    %169 = vmatpush1.bf16.msra.mxu0 %v147
    %170 = vmatprep.subr.bf16.mxu0 0
    %171 = vmatpush1.bf16.msra.mxu0 %v146
    %172 = vmatprep.subr.bf16.mxu0 0
    %173 = vmatpush1.bf16.msra.mxu0 %v145
    %174 = vmatprep.subr.bf16.mxu0 0
    %175 = vmatpush1.bf16.msra.mxu0 %v144
    %176 = vmatprep.subr.bf16.mxu0 0
    %177 = vmatpush2.bf16.msra.mxu0 0
    %178 = vmatprep.subr.bf16.mxu0 0
    %179 = vmatpush2.bf16.msra.mxu0 0
    %180 = vmatprep.subr.bf16.mxu0 0
    %181 = vmatpush2.bf16.msra.mxu0 0
    %182 = vmatprep.subr.bf16.mxu0 0
    %183 = vmatpush2.bf16.msra.mxu0 0
    %184 = vmatprep.subr.bf16.mxu0 0
    %185 = vmatpush2.bf16.msra.mxu0 0
    %186 = vmatprep.subr.bf16.mxu0 0
    %187 = vmatpush2.bf16.msra.mxu0 0
    %188 = vmatprep.subr.bf16.mxu0 0
    %189 = vmatpush2.bf16.msra.mxu0 0
    %190 = vmatprep.subr.bf16.mxu0 0
    %191 = vmatpush2.bf16.msra.mxu0 0
    %192 = vmatprep.mubr.bf16.mxu0 0
    %193 = vmatmul.mubr.bf16.gmra.mxu0 %v110
    %v194 = vpop.f32.mrf.mxu0
    %v195 = vadd.f32 0.0, %v194
    %v196 = vpop.f32.mrf.mxu0
    %v197 = vpop.f32.mrf.mxu0
    %v198 = vadd.f32 0.0, %v197
    %v199 = vpop.f32.mrf.mxu0
    %200 = vdwg.mxu0
    %v201 = vadd.f32 %v86, %v195
    %v202 = vadd.f32 %v87, %v198
    %203 = vst [vmem:[#allocation2] sm:$0xff] %v201
    %204 = vst [vmem:[#allocation2 + $0x8] sm:$0xff] %v202
    // Predicated region
    $region46: #{tpu_custom_call.1} parent=1 // pred_check
      %p205 = pneg %p80
    $region47: #{tpu_custom_call.1} parent=1 // pred_check_branch
      %207 = sbr.rel (%p205) target = $region49
    $region48: #{tpu_custom_call.1} parent=1 // pred_region
      %v208 = vld [vmem:[#allocation2] sm:$0xff]
      %v209 = vld [vmem:[#allocation2 + $0x8] sm:$0xff]
      %v210 = vld [vmem:[%s3] sm:$0xff]
      %v211 = vld [vmem:[%s3 + $0x8] sm:$0xff]
      %213 = vset.pattern.permute.xlu0 0
      %214 = vperm.xlu0 %213, %v210
      %v215 = vpop.permute.xlu0 %214
      %218 = vset.pattern.permute.xlu0 0
      %219 = vperm.xlu0 %218, %v211
      %v220 = vpop.permute.xlu0 %219
      %v222 = vmul.f32 %v208, %v215
      %v223 = vmul.f32 %v209, %v220
      %v224 = vld [vmem:[%s1] sm:$0xff]
      %v225 = vld [vmem:[%s1 + $0x8] sm:$0xff]
      %v226 = vld [vmem:[#allocation8] sm:$0xff]
      %v227 = vld [vmem:[#allocation8 + $0x8] sm:$0xff]
      %v228 = vld [vmem:[#allocation8 + $0x10] sm:$0xff]
      %v229 = vld [vmem:[#allocation8 + $0x18] sm:$0xff]
      %v230 = vld [vmem:[#allocation8 + $0x20] sm:$0xff]
      %v231 = vld [vmem:[#allocation8 + $0x28] sm:$0xff]
      %v232 = vld [vmem:[#allocation8 + $0x30] sm:$0xff]
      %v233 = vld [vmem:[#allocation8 + $0x38] sm:$0xff]
      %v234 = vld [vmem:[#allocation8 + $0x40] sm:$0xff]
      %v235 = vld [vmem:[#allocation8 + $0x48] sm:$0xff]
      %v236 = vld [vmem:[#allocation8 + $0x50] sm:$0xff]
      %v237 = vld [vmem:[#allocation8 + $0x58] sm:$0xff]
      %v238 = vld [vmem:[#allocation8 + $0x60] sm:$0xff]
      %v239 = vld [vmem:[#allocation8 + $0x68] sm:$0xff]
      %v240 = vld [vmem:[#allocation8 + $0x70] sm:$0xff]
      %v241 = vld [vmem:[#allocation8 + $0x78] sm:$0xff]
      %v242 = vld [vmem:[#allocation9] sm:$0xff]
      %v243 = vld [vmem:[#allocation9 + $0x8] sm:$0xff]
      %v244 = vld [vmem:[#allocation9 + $0x10] sm:$0xff]
      %v245 = vld [vmem:[#allocation9 + $0x18] sm:$0xff]
      %v246 = vld [vmem:[#allocation9 + $0x20] sm:$0xff]
      %v247 = vld [vmem:[#allocation9 + $0x28] sm:$0xff]
      %v248 = vld [vmem:[#allocation9 + $0x30] sm:$0xff]
      %v249 = vld [vmem:[#allocation9 + $0x38] sm:$0xff]
      %v250 = vld [vmem:[#allocation9 + $0x40] sm:$0xff]
      %v251 = vld [vmem:[#allocation9 + $0x48] sm:$0xff]
      %v252 = vld [vmem:[#allocation9 + $0x50] sm:$0xff]
      %v253 = vld [vmem:[#allocation9 + $0x58] sm:$0xff]
      %v254 = vld [vmem:[#allocation9 + $0x60] sm:$0xff]
      %v255 = vld [vmem:[#allocation9 + $0x68] sm:$0xff]
      %v256 = vld [vmem:[#allocation9 + $0x70] sm:$0xff]
      %v257 = vld [vmem:[#allocation9 + $0x78] sm:$0xff]
      %258 = vmatprep.subr.mxu0 0.0
      %259 = vmatpush1.msra.mxu0 %v257
      %260 = vmatprep.subr.mxu0 0.0
      %261 = vmatpush1.msra.mxu0 %v256
      %262 = vmatprep.subr.mxu0 0.0
      %263 = vmatpush1.msra.mxu0 %v255
      %264 = vmatprep.subr.mxu0 0.0
      %265 = vmatpush1.msra.mxu0 %v254
      %266 = vmatprep.subr.mxu0 0.0
      %267 = vmatpush1.msra.mxu0 %v253
      %268 = vmatprep.subr.mxu0 0.0
      %269 = vmatpush1.msra.mxu0 %v252
      %270 = vmatprep.subr.mxu0 0.0
      %271 = vmatpush1.msra.mxu0 %v251
      %272 = vmatprep.subr.mxu0 0.0
      %273 = vmatpush1.msra.mxu0 %v250
      %274 = vmatprep.subr.mxu0 0.0
      %275 = vmatpush1.msra.mxu0 %v249
      %276 = vmatprep.subr.mxu0 0.0
      %277 = vmatpush1.msra.mxu0 %v248
      %278 = vmatprep.subr.mxu0 0.0
      %279 = vmatpush1.msra.mxu0 %v247
      %280 = vmatprep.subr.mxu0 0.0
      %281 = vmatpush1.msra.mxu0 %v246
      %282 = vmatprep.subr.mxu0 0.0
      %283 = vmatpush1.msra.mxu0 %v245
      %284 = vmatprep.subr.mxu0 0.0
      %285 = vmatpush1.msra.mxu0 %v244
      %286 = vmatprep.subr.mxu0 0.0
      %287 = vmatpush1.msra.mxu0 %v243
      %288 = vmatprep.subr.mxu0 0.0
      %289 = vmatpush1.msra.mxu0 %v242
      %290 = vmatprep.subr.mxu0 0.0
      %291 = vmatpush2.msra.mxu0 0.0
      %292 = vmatprep.subr.mxu0 0.0
      %293 = vmatpush2.msra.mxu0 0.0
      %294 = vmatprep.subr.mxu0 0.0
      %295 = vmatpush2.msra.mxu0 0.0
      %296 = vmatprep.subr.mxu0 0.0
      %297 = vmatpush2.msra.mxu0 0.0
      %298 = vmatprep.subr.mxu0 0.0
      %299 = vmatpush2.msra.mxu0 0.0
      %300 = vmatprep.subr.mxu0 0.0
      %301 = vmatpush2.msra.mxu0 0.0
      %302 = vmatprep.subr.mxu0 0.0
      %303 = vmatpush2.msra.mxu0 0.0
      %304 = vmatprep.subr.mxu0 0.0
      %305 = vmatpush2.msra.mxu0 0.0
      %306 = vmatprep.subr.mxu0 0.0
      %307 = vmatpush2.msra.mxu0 0.0
      %308 = vmatprep.subr.mxu0 0.0
      %309 = vmatpush2.msra.mxu0 0.0
      %310 = vmatprep.subr.mxu0 0.0
      %311 = vmatpush2.msra.mxu0 0.0
      %312 = vmatprep.subr.mxu0 0.0
      %313 = vmatpush2.msra.mxu0 0.0
      %314 = vmatprep.subr.mxu0 0.0
      %315 = vmatpush2.msra.mxu0 0.0
      %316 = vmatprep.subr.mxu0 0.0
      %317 = vmatpush2.msra.mxu0 0.0
      %318 = vmatprep.subr.mxu0 0.0
      %319 = vmatpush2.msra.mxu0 0.0
      %320 = vmatprep.subr.mxu0 0.0
      %321 = vmatpush2.msra.mxu0 0.0
      %322 = vmatprep.mubr.f32.mxu0 0.0
      %323 = vmatmul.mubr.f32.gmra.mxu0 %v222
      %v324 = vpop.f32.mrf.mxu0
      %v325 = vadd.f32 0.0, %v324
      %v326 = vpop.f32.mrf.mxu0
      %327 = vmatprep.mubr.f32.mxu0 0.0
      %328 = vmatmul.mubr.f32.gmra.mxu0 %v223
      %v329 = vpop.f32.mrf.mxu0
      %v330 = vadd.f32 0.0, %v329
      %v331 = vpop.f32.mrf.mxu0
      %332 = vdwg.mxu0
      %333 = vmatprep.subr.mxu0 0.0
      %334 = vmatpush1.msra.mxu0 %v241
      %335 = vmatprep.subr.mxu0 0.0
      %336 = vmatpush1.msra.mxu0 %v240
      %337 = vmatprep.subr.mxu0 0.0
      %338 = vmatpush1.msra.mxu0 %v239
      %339 = vmatprep.subr.mxu0 0.0
      %340 = vmatpush1.msra.mxu0 %v238
      %341 = vmatprep.subr.mxu0 0.0
      %342 = vmatpush1.msra.mxu0 %v237
      %343 = vmatprep.subr.mxu0 0.0
      %344 = vmatpush1.msra.mxu0 %v236
      %345 = vmatprep.subr.mxu0 0.0
      %346 = vmatpush1.msra.mxu0 %v235
      %347 = vmatprep.subr.mxu0 0.0
      %348 = vmatpush1.msra.mxu0 %v234
      %349 = vmatprep.subr.mxu0 0.0
      %350 = vmatpush1.msra.mxu0 %v233
      %351 = vmatprep.subr.mxu0 0.0
      %352 = vmatpush1.msra.mxu0 %v232
      %353 = vmatprep.subr.mxu0 0.0
      %354 = vmatpush1.msra.mxu0 %v231
      %355 = vmatprep.subr.mxu0 0.0
      %356 = vmatpush1.msra.mxu0 %v230
      %357 = vmatprep.subr.mxu0 0.0
      %358 = vmatpush1.msra.mxu0 %v229
      %359 = vmatprep.subr.mxu0 0.0
      %360 = vmatpush1.msra.mxu0 %v228
      %361 = vmatprep.subr.mxu0 0.0
      %362 = vmatpush1.msra.mxu0 %v227
      %363 = vmatprep.subr.mxu0 0.0
      %364 = vmatpush1.msra.mxu0 %v226
      %365 = vmatprep.subr.mxu0 0.0
      %366 = vmatpush2.msra.mxu0 0.0
      %367 = vmatprep.subr.mxu0 0.0
      %368 = vmatpush2.msra.mxu0 0.0
      %369 = vmatprep.subr.mxu0 0.0
      %370 = vmatpush2.msra.mxu0 0.0
      %371 = vmatprep.subr.mxu0 0.0
      %372 = vmatpush2.msra.mxu0 0.0
      %373 = vmatprep.subr.mxu0 0.0
      %374 = vmatpush2.msra.mxu0 0.0
      %375 = vmatprep.subr.mxu0 0.0
      %376 = vmatpush2.msra.mxu0 0.0
      %377 = vmatprep.subr.mxu0 0.0
      %378 = vmatpush2.msra.mxu0 0.0
      %379 = vmatprep.subr.mxu0 0.0
      %380 = vmatpush2.msra.mxu0 0.0
      %381 = vmatprep.subr.mxu0 0.0
      %382 = vmatpush2.msra.mxu0 0.0
      %383 = vmatprep.subr.mxu0 0.0
      %384 = vmatpush2.msra.mxu0 0.0
      %385 = vmatprep.subr.mxu0 0.0
      %386 = vmatpush2.msra.mxu0 0.0
      %387 = vmatprep.subr.mxu0 0.0
      %388 = vmatpush2.msra.mxu0 0.0
      %389 = vmatprep.subr.mxu0 0.0
      %390 = vmatpush2.msra.mxu0 0.0
      %391 = vmatprep.subr.mxu0 0.0
      %392 = vmatpush2.msra.mxu0 0.0
      %393 = vmatprep.subr.mxu0 0.0
      %394 = vmatpush2.msra.mxu0 0.0
      %395 = vmatprep.subr.mxu0 0.0
      %396 = vmatpush2.msra.mxu0 0.0
      %397 = vmatprep.mubr.f32.mxu0 0.0
      %398 = vmatmul.mubr.f32.gmra.mxu0 %v224
      %v399 = vpop.f32.mrf.mxu0
      %v400 = vadd.f32 %v325, %v399
      %v401 = vpop.f32.mrf.mxu0
      %402 = vmatprep.mubr.f32.mxu0 0.0
      %403 = vmatmul.mubr.f32.gmra.mxu0 %v225
      %v404 = vpop.f32.mrf.mxu0
      %v405 = vadd.f32 %v330, %v404
      %v406 = vpop.f32.mrf.mxu0
      %407 = vdwg.mxu0
      %v408 = vmax.f32 %v400, 0.0
      %v409 = vmax.f32 %v405, 0.0
      %410 = vst [vmem:[#allocation11] sm:$0xff] %v408
      %411 = vst [vmem:[#allocation11 + $0x8] sm:$0xff] %v409
    $region49: #{tpu_custom_call.1} parent=1 // pred_fallthru
      _
    // Predicated region
    $region50: #{tpu_custom_call.1} parent=1 // pred_check
      _
    $region51: #{tpu_custom_call.1} parent=1 // pred_check_branch
      %413 = sbr.rel (0) target = $region53
    $region52: #{tpu_custom_call.1} parent=1 // pred_region
      %s415 = ssub.s32 256, 256
      %416 = vsyncadd [#allocation5], %s415
      %s417 = sshll.u32 [#allocation11], 4
      %s418 = int_to_ptr.vmem [resolvable:$true] %s417
      %423 = dma.vmem_to_hbm [thread:$0]  %s418, 256, %s6, [#allocation5], 128, 128, 8
    $region53: #{tpu_custom_call.1} parent=1 // pred_fallthru
      _
    // Predicated region
    $region54: #{tpu_custom_call.1} parent=1 // pred_check
      _
    $region55: #{tpu_custom_call.1} parent=1 // pred_check_branch
      %425 = sbr.rel (0) target = $region57
    $region56: #{tpu_custom_call.1} parent=1 // pred_region
      %426 = dma.done [#allocation5], 256
    $region57: #{tpu_custom_call.1} parent=1 // pred_fallthru
      _
    %427 = vsyncpa [#allocation4], 1
    %428 = vsyncpa [#allocation7], 1
    %429 = vsyncpa [#allocation10], 1
    %430 = vsyncpa [#allocation5], 1

</llo_original>
